<compile_context>
chip_gen: v7x
topology: tpu7x:2x2x1
jax: 0.10.0
libtpu: 0.0.40
codegen_flags: <defaults>
</compile_context>

<pallas_src>
import functools

import jax
import jax.numpy as jnp
import numpy as np
from jax.experimental import pallas as pl
from jax.experimental.pallas import tpu as pltpu


def _mha_kernel(x_ref, wqkv_ref, bqkv_ref, wo_ref, bo_ref, o_ref,
                *, num_heads, head_dim):
    # x_ref block: (Bb, S, D) f32; wqkv (D, 3E) bf16 (Q cols pre-scaled);
    # bqkv (1, 3E) f32 (Q slice pre-scaled); wo (E, E) bf16; bo (1, E) f32;
    # o_ref block: (Bb, S, E) f32.
    Bb, S, D = x_ref.shape
    E = num_heads * head_dim
    BS = Bb * S
    N = num_heads * Bb          # flat (head, batch) attention-batch dim

    # ---- fused QKV projection: bf16 MXU operands, f32 accumulation ----------
    x2 = x_ref[...].reshape(BS, D).astype(jnp.bfloat16)
    qkv = jnp.dot(x2, wqkv_ref[...], preferred_element_type=jnp.float32)
    qkv = (qkv + bqkv_ref[...]).astype(jnp.bfloat16)             # (BS, 3E)

    # ---- one combined head relayout (done in bf16) ---------------------------
    # The wrapper re-orders QKV features to f = (g*H + h)*hd + d, so a single
    # reshape + lane-fixed transpose splits g/h; q/k/v are free leading-dim
    # indexes afterwards (no per-tensor lane slices / transposes).
    qkv = qkv.reshape(BS, 3 * num_heads, head_dim)
    qkv = jnp.transpose(qkv, (1, 0, 2))                          # (3H, BS, hd)
    qkv = qkv.reshape(3, N, S, head_dim)                         # n = h*Bb + b
    q, k, v = qkv[0], qkv[1], qkv[2]

    # ---- scaled dot-product attention (scale folded into q; f32 stats) ------
    s = jnp.einsum('nqd,nkd->nqk', q, k, preferred_element_type=jnp.float32)
    s = s - jnp.max(s, axis=-1, keepdims=True)
    p = jnp.exp(s)
    # approx reciprocal -> rows normalized to ~1e-3 relative (EUP slot, ~free).
    p = p * pl.reciprocal(jnp.sum(p, axis=-1, keepdims=True), approx=True)

    vals = jnp.einsum('nqk,nkd->nqd', p.astype(jnp.bfloat16), v,
                      preferred_element_type=jnp.float32)        # (N, S, hd)

    # ---- un-head relayout (bf16) + output projection -------------------------
    vals = vals.astype(jnp.bfloat16).reshape(num_heads, Bb, S, head_dim)
    vals = jnp.transpose(vals, (1, 2, 0, 3)).reshape(BS, E)      # (b, s, h*hd)
    o = jnp.dot(vals, wo_ref[...], preferred_element_type=jnp.float32)
    o = o + bo_ref[...]
    o_ref[...] = o.reshape(Bb, S, E).astype(o_ref.dtype)


def _pick_batch_block(B, S):
    """Largest power-of-two divisor of B such that (a) the per-step block has
    <= ~512 rows (amortize step overhead, fill MXU M) and (b) the grid has >= 2
    steps whenever B >= 2 (v7x has 2 TensorCores; a 1-step 'parallel' grid
    leaves one idle).  Falls back to 1."""
    cands = [c for c in (128, 64, 32, 16, 8, 4, 2, 1) if B % c == 0]
    for c in cands:
        if c * S <= 512 and (B // c >= 2 or B == 1):
            return c
    return 1


def multihead_attention_encoder(x, w_qkv, b_qkv, w_o, b_o, num_heads):
    """x: (B, S, D) f32.  PyTorch nn.Linear layouts: w_qkv (3E, D), b_qkv (3E,),
    w_o (E, E), b_o (E,).  All re-layouts / scale folding happen once at trace
    time (wrapper side)."""
    B, S, D = x.shape
    three_E = w_qkv.shape[0]
    E = three_E // 3
    head_dim = E // num_heads
    # The module uses temperature = sqrt(embed_dim) (NOT sqrt(head_dim)).
    inv_temperature = 1.0 / (float(E) ** 0.5)

    # PyTorch qkv_proj feature layout: f = h*3*hd + g*hd + d (reshape to
    # (B,S,H,3hd) then chunk -> per-head interleaved [q|k|v]).  Re-order to
    # f' = (g*H + h)*hd + d so the kernel splits g/h with one reshape+transpose.
    perm = np.arange(three_E).reshape(num_heads, 3, head_dim)
    perm = perm.transpose(1, 0, 2).reshape(-1)

    # Fold the softmax scale into the Q rows (weight AND bias), pre-transpose to
    # x @ W form, cast MXU weights to bf16 once.
    scale = np.ones((three_E, 1), np.float32)
    scale[:E] = inv_temperature
    wqkv_p = jnp.asarray(w_qkv, jnp.float32)[perm, :] * scale          # (3E, D)
    bqkv_p = jnp.asarray(b_qkv, jnp.float32)[perm] * scale[:, 0]       # (3E,)
    wqkv_t = wqkv_p.T.astype(jnp.bfloat16)                             # (D, 3E)
    bqkv2 = bqkv_p.reshape(1, three_E)                                 # f32
    wo_t = jnp.asarray(w_o, jnp.float32).T.astype(jnp.bfloat16)        # (E, E)
    bo2 = jnp.asarray(b_o, jnp.float32).reshape(1, E)                  # f32

    bb = _pick_batch_block(B, S)

    kernel = functools.partial(_mha_kernel, num_heads=num_heads,
                               head_dim=head_dim)

    return pl.pallas_call(
        kernel,
        out_shape=jax.ShapeDtypeStruct((B, S, E), jnp.float32),
        grid_spec=pltpu.PrefetchScalarGridSpec(
            num_scalar_prefetch=0,
            grid=(B // bb,),
            in_specs=[
                pl.BlockSpec((bb, S, D), lambda b: (b, 0, 0)),
                pl.BlockSpec((D, three_E), lambda b: (0, 0)),
                pl.BlockSpec((1, three_E), lambda b: (0, 0)),
                pl.BlockSpec((E, E), lambda b: (0, 0)),
                pl.BlockSpec((1, E), lambda b: (0, 0)),
            ],
            out_specs=pl.BlockSpec((bb, S, E), lambda b: (b, 0, 0)),
        ),
        # Batch-block axis is independent -> shardable across v7x's 2 TCs.
        compiler_params=pltpu.CompilerParams(
            dimension_semantics=("parallel",)),
    )(x, wqkv_t, bqkv2, wo_t, bo2)


def _reference(x, w_qkv, b_qkv, w_o, b_o, num_heads):
    """Plain-JAX f32 reference mirroring the PyTorch forward (eval mode)."""
    B, S, D = x.shape
    E = w_qkv.shape[0] // 3
    hd = E // num_heads
    qkv = jnp.einsum("bsd,ed->bse", x, w_qkv) + b_qkv
    qkv = qkv.reshape(B, S, num_heads, 3 * hd).transpose(0, 2, 1, 3)
    q, k, v = jnp.split(qkv, 3, axis=-1)
    attn = jnp.einsum("bhqd,bhkd->bhqk", q, k) / (float(E) ** 0.5)
    attn = jax.nn.softmax(attn, axis=-1)
    vals = jnp.einsum("bhqk,bhkd->bhqd", attn, v)
    vals = vals.transpose(0, 2, 1, 3).reshape(B, S, E)
    return jnp.einsum("bse,fe->bsf", vals, w_o) + b_o


if __name__ == "__main__":
    # Small shapes consistent with the module: B=2, S=8, input_dim=embed_dim=32, heads=4
    B, S, D = 2, 8, 32
    E = 32
    num_heads = 4

    key = jax.random.PRNGKey(0)
    kx, k1, k2 = jax.random.split(key, 3)

    x = jax.random.normal(kx, (B, S, D), dtype=jnp.float32)

    # Deterministic xavier-uniform-style init (matches _reset_parameters intent);
    # biases zero.
    lim_qkv = (6.0 / (D + 3 * E)) ** 0.5
    w_qkv = jax.random.uniform(k1, (3 * E, D), minval=-lim_qkv, maxval=lim_qkv,
                               dtype=jnp.float32)
    b_qkv = jnp.zeros((3 * E,), dtype=jnp.float32)
    lim_o = (6.0 / (E + E)) ** 0.5
    w_o = jax.random.uniform(k2, (E, E), minval=-lim_o, maxval=lim_o,
                             dtype=jnp.float32)
    b_o = jnp.zeros((E,), dtype=jnp.float32)

    out = multihead_attention_encoder(x, w_qkv, b_qkv, w_o, b_o, num_heads)
    out = jax.block_until_ready(out)

    ref = _reference(x, w_qkv, b_qkv, w_o, b_o, num_heads)
    assert out.shape == (B, S, E)
    max_err = float(jnp.max(jnp.abs(out - ref)))
    # bf16 MXU operands + approx reciprocal -> slightly looser tolerance than f32.
    assert max_err < 5e-2, f"mismatch vs reference: max abs err {max_err}"

    print("KERNEL_OK")
</pallas_src>

<mosaic_0001>
module attributes {stable_mosaic.version = 11 : i64} {
  func.func @_mha_kernel(%arg0: i32, %arg1: memref<1x8x32xf32, #tpu.memory_space<vmem>>, %arg2: memref<32x96xbf16, #tpu.memory_space<vmem>>, %arg3: memref<1x96xf32, #tpu.memory_space<vmem>>, %arg4: memref<32x32xbf16, #tpu.memory_space<vmem>>, %arg5: memref<1x32xf32, #tpu.memory_space<vmem>>, %arg6: memref<1x8x32xf32, #tpu.memory_space<vmem>>) attributes {dimension_semantics = [#tpu.dimension_semantics<parallel>], iteration_bounds = array<i64: 2>, scalar_prefetch = 0 : i64, scratch_operands = 0 : i64, tpu.core_type = #tpu.core_type<tc>, window_params = [{transform_indices = @transform_0, window_bounds = array<i64: 1, 8, 32>}, {pipeline_mode = #tpu.pipeline_mode<synchronous>, transform_indices = @transform_1, window_bounds = array<i64: 32, 96>}, {pipeline_mode = #tpu.pipeline_mode<synchronous>, transform_indices = @transform_2, window_bounds = array<i64: 1, 96>}, {pipeline_mode = #tpu.pipeline_mode<synchronous>, transform_indices = @transform_3, window_bounds = array<i64: 32, 32>}, {pipeline_mode = #tpu.pipeline_mode<synchronous>, transform_indices = @transform_4, window_bounds = array<i64: 1, 32>}, {transform_indices = @transform_5, window_bounds = array<i64: 1, 8, 32>}]} {
    %c0 = arith.constant 0 : index
    %c0_0 = arith.constant 0 : index
    %c0_1 = arith.constant 0 : index
    %0 = vector.load %arg1[%c0, %c0_0, %c0_1] : memref<1x8x32xf32, #tpu.memory_space<vmem>>, vector<1x8x32xf32>
    %1 = vector.shape_cast %0 : vector<1x8x32xf32> to vector<8x32xf32>
    %2 = arith.truncf %1 : vector<8x32xf32> to vector<8x32xbf16>
    %c0_2 = arith.constant 0 : index
    %c0_3 = arith.constant 0 : index
    %3 = vector.load %arg2[%c0_2, %c0_3] : memref<32x96xbf16, #tpu.memory_space<vmem>>, vector<32x96xbf16>
    %cst = arith.constant dense<0.000000e+00> : vector<8x96xf32>
    %4 = tpu.matmul %2, %3, %cst {dimension_numbers = #tpu.dot_dimension_numbers<[1], [0], [0], [1], [0, 0, 1, 1], [], []>} : vector<8x32xbf16>, vector<32x96xbf16>, vector<8x96xf32> -> vector<8x96xf32>
    %c0_4 = arith.constant 0 : index
    %c0_5 = arith.constant 0 : index
    %5 = vector.load %arg3[%c0_4, %c0_5] : memref<1x96xf32, #tpu.memory_space<vmem>>, vector<1x96xf32>
    %6 = vector.broadcast %5 : vector<1x96xf32> to vector<8x96xf32>
    %7 = arith.addf %4, %6 : vector<8x96xf32>
    %8 = arith.truncf %7 : vector<8x96xf32> to vector<8x96xbf16>
    %9 = vector.shape_cast %8 : vector<8x96xbf16> to vector<8x12x8xbf16>
    %10 = tpu.transpose %9, [1, 0, 2] : vector<8x12x8xbf16> -> vector<12x8x8xbf16>
    %11 = vector.shape_cast %10 : vector<12x8x8xbf16> to vector<3x4x8x8xbf16>
    %12 = vector.extract_strided_slice %11 {offsets = [0, 0, 0, 0], sizes = [1, 4, 8, 8], strides = [1, 1, 1, 1]} : vector<3x4x8x8xbf16> to vector<1x4x8x8xbf16>
    %13 = vector.shape_cast %12 : vector<1x4x8x8xbf16> to vector<4x8x8xbf16>
    %14 = vector.extract_strided_slice %11 {offsets = [1, 0, 0, 0], sizes = [1, 4, 8, 8], strides = [1, 1, 1, 1]} : vector<3x4x8x8xbf16> to vector<1x4x8x8xbf16>
    %15 = vector.shape_cast %14 : vector<1x4x8x8xbf16> to vector<4x8x8xbf16>
    %16 = vector.extract_strided_slice %11 {offsets = [2, 0, 0, 0], sizes = [1, 4, 8, 8], strides = [1, 1, 1, 1]} : vector<3x4x8x8xbf16> to vector<1x4x8x8xbf16>
    %17 = vector.shape_cast %16 : vector<1x4x8x8xbf16> to vector<4x8x8xbf16>
    "tpu.trace_start"() <{level = 10 : i32, message = "nqd,nkd->nqk"}> : () -> ()
    %cst_6 = arith.constant dense<0.000000e+00> : vector<4x8x8xf32>
    %18 = tpu.matmul %13, %15, %cst_6 {dimension_numbers = #tpu.dot_dimension_numbers<[2], [2], [1], [1], [0, 0, 0, 1, 1, 1], [0], [0]>} : vector<4x8x8xbf16>, vector<4x8x8xbf16>, vector<4x8x8xf32> -> vector<4x8x8xf32>
    "tpu.trace_stop"() : () -> ()
    %cst_7 = arith.constant dense<0xFF800000> : vector<4x8xf32>
    %19 = vector.multi_reduction <maximumf>, %18, %cst_7 [2] : vector<4x8x8xf32> to vector<4x8xf32>
    %20 = vector.shape_cast %19 : vector<4x8xf32> to vector<4x8x1xf32>
    %21 = vector.broadcast %20 : vector<4x8x1xf32> to vector<4x8x8xf32>
    %22 = arith.subf %18, %21 : vector<4x8x8xf32>
    %23 = math.exp %22 : vector<4x8x8xf32>
    %cst_8 = arith.constant dense<0.000000e+00> : vector<4x8xf32>
    %24 = vector.multi_reduction <add>, %23, %cst_8 [2] : vector<4x8x8xf32> to vector<4x8xf32>
    %25 = vector.shape_cast %24 : vector<4x8xf32> to vector<4x8x1xf32>
    %26 = tpu.reciprocal %25 {approx = true} : vector<4x8x1xf32> -> vector<4x8x1xf32>
    %27 = vector.broadcast %26 : vector<4x8x1xf32> to vector<4x8x8xf32>
    %28 = arith.mulf %23, %27 : vector<4x8x8xf32>
    %29 = arith.truncf %28 : vector<4x8x8xf32> to vector<4x8x8xbf16>
    "tpu.trace_start"() <{level = 10 : i32, message = "nqk,nkd->nqd"}> : () -> ()
    %cst_9 = arith.constant dense<0.000000e+00> : vector<4x8x8xf32>
    %30 = tpu.matmul %29, %17, %cst_9 {dimension_numbers = #tpu.dot_dimension_numbers<[2], [1], [1], [2], [0, 0, 0, 1, 1, 2], [0], [0]>} : vector<4x8x8xbf16>, vector<4x8x8xbf16>, vector<4x8x8xf32> -> vector<4x8x8xf32>
    "tpu.trace_stop"() : () -> ()
    %31 = arith.truncf %30 : vector<4x8x8xf32> to vector<4x8x8xbf16>
    %32 = vector.shape_cast %31 : vector<4x8x8xbf16> to vector<4x1x8x8xbf16>
    %33 = tpu.transpose %32, [1, 2, 0, 3] : vector<4x1x8x8xbf16> -> vector<1x8x4x8xbf16>
    %34 = vector.shape_cast %33 : vector<1x8x4x8xbf16> to vector<8x32xbf16>
    %c0_10 = arith.constant 0 : index
    %c0_11 = arith.constant 0 : index
    %35 = vector.load %arg4[%c0_10, %c0_11] : memref<32x32xbf16, #tpu.memory_space<vmem>>, vector<32x32xbf16>
    %cst_12 = arith.constant dense<0.000000e+00> : vector<8x32xf32>
    %36 = tpu.matmul %34, %35, %cst_12 {dimension_numbers = #tpu.dot_dimension_numbers<[1], [0], [0], [1], [0, 0, 1, 1], [], []>} : vector<8x32xbf16>, vector<32x32xbf16>, vector<8x32xf32> -> vector<8x32xf32>
    %c0_13 = arith.constant 0 : index
    %c0_14 = arith.constant 0 : index
    %37 = vector.load %arg5[%c0_13, %c0_14] : memref<1x32xf32, #tpu.memory_space<vmem>>, vector<1x32xf32>
    %38 = vector.broadcast %37 : vector<1x32xf32> to vector<8x32xf32>
    %39 = arith.addf %36, %38 : vector<8x32xf32>
    %40 = vector.shape_cast %39 : vector<8x32xf32> to vector<1x8x32xf32>
    %c0_15 = arith.constant 0 : index
    %c0_16 = arith.constant 0 : index
    %c0_17 = arith.constant 0 : index
    %41 = vector.load %arg6[%c0_15, %c0_16, %c0_17] : memref<1x8x32xf32, #tpu.memory_space<vmem>>, vector<1x8x32xf32>
    tpu.vector_store %arg6[%c0_15, %c0_16, %c0_17], %40 {strides = array<i32>} : memref<1x8x32xf32, #tpu.memory_space<vmem>>, vector<1x8x32xf32>,
    return
  }
  func.func @transform_0(%arg0: i32) -> (i32, i32, i32) {
    %c0_i32 = arith.constant 0 : i32
    %c0_i32_0 = arith.constant 0 : i32
    %c0_i32_1 = arith.constant 0 : i32
    return %arg0, %c0_i32, %c0_i32_0 : i32, i32, i32
  }
  func.func @transform_1(%arg0: i32) -> (i32, i32) {
    %c0_i32 = arith.constant 0 : i32
    %c0_i32_0 = arith.constant 0 : i32
    %c0_i32_1 = arith.constant 0 : i32
    return %c0_i32, %c0_i32_0 : i32, i32
  }
  func.func @transform_2(%arg0: i32) -> (i32, i32) {
    %c0_i32 = arith.constant 0 : i32
    %c0_i32_0 = arith.constant 0 : i32
    %c0_i32_1 = arith.constant 0 : i32
    return %c0_i32, %c0_i32_0 : i32, i32
  }
  func.func @transform_3(%arg0: i32) -> (i32, i32) {
    %c0_i32 = arith.constant 0 : i32
    %c0_i32_0 = arith.constant 0 : i32
    %c0_i32_1 = arith.constant 0 : i32
    return %c0_i32, %c0_i32_0 : i32, i32
  }
  func.func @transform_4(%arg0: i32) -> (i32, i32) {
    %c0_i32 = arith.constant 0 : i32
    %c0_i32_0 = arith.constant 0 : i32
    %c0_i32_1 = arith.constant 0 : i32
    return %c0_i32, %c0_i32_0 : i32, i32
  }
  func.func @transform_5(%arg0: i32) -> (i32, i32, i32) {
    %c0_i32 = arith.constant 0 : i32
    %c0_i32_0 = arith.constant 0 : i32
    %c0_i32_1 = arith.constant 0 : i32
    return %arg0, %c0_i32, %c0_i32_0 : i32, i32, i32
  }
}

</mosaic_0001>

<llo_original>
// kernel: tpu_custom_call.1
$region0: #{tpu_custom_call.1}
  #allocation0 [shape = 'u32[]', space=smem, size = 0x4, offset = 0x4, fixed_abs, tag = 'smem constant byte address 0x4 - core index']
  #allocation1 [shape = 'u32[144,128]{1,0:T(1,128)}', space=vmem, size = 0x12000, scoped, tag = 'internal scratch']
  %s0 = inlined_call_operand.hbm [shape: f32[2,8,32], index: 0, kind: input, shape index: {}]
  %s1 = inlined_call_operand.hbm [shape: bf16[32,96], index: 1, kind: input, shape index: {}]
  %s2 = inlined_call_operand.vmem [shape: f32[1,96], index: 2, kind: input, shape index: {}]
  %s3 = inlined_call_operand.hbm [shape: bf16[32,32], index: 3, kind: input, shape index: {}]
  %s4 = inlined_call_operand.vmem [shape: f32[1,32], index: 4, kind: input, shape index: {}]
  %s5 = inlined_call_operand.hbm [shape: f32[2,8,32], index: 5, kind: output, shape index: {}]
  %s6 = sld [smem:[#allocation0]]
  $region65: #{tpu_custom_call.1} parent=0
    _
  %s8 = ssub.s32 1, %s6
  %s9 = scalar_select 0, %s8, %s6
  $region1: #{tpu_custom_call.1} parent=0
    #allocation2 [shape = 'u8[8192]{0}', space=vmem, size = 0x2000, scoped, tag = 'input window, operand 0']
    #allocation3 [shape = 's32[2]{0}', space=sflag, size = 0x8, scoped, tag = 'scoped memory for tpu_custom_call.1']
    #allocation4 [shape = 's32[2]{0}', space=sflag, size = 0x8, scoped, tag = 'scoped memory for tpu_custom_call.1']
    #allocation5 [shape = 'u8[8192]{0}', space=vmem, size = 0x2000, scoped, tag = 'input window, operand 1, single buffered']
    #allocation6 [shape = 's32[1]{0}', space=sflag, size = 0x4, scoped, tag = 'scoped memory for tpu_custom_call.1']
    #allocation7 [shape = 'u8[8192]{0}', space=vmem, size = 0x2000, scoped, tag = 'input window, operand 3, single buffered']
    #allocation8 [shape = 'u8[8192]{0}', space=vmem, size = 0x2000, scoped, tag = 'output window, operand 0']
    %10 = vsyncpa [#allocation3], 0
    %s11 = scalar_lea.sflag [#allocation3], 1
    %12 = vsyncpa %s11, 0
    %13 = vsyncpa [#allocation6], 0
    %14 = vsyncpa [#allocation4], 0
    %s15 = scalar_lea.sflag [#allocation4], 1
    %16 = vsyncpa %s15, 0
    loop: start=0, step=1, limit=4
    $region2: #{tpu_custom_call.1} parent=1 // loop_pre_header
      _
    $region3: #{tpu_custom_call.1} parent=1 // loop_header
      %s18 = sphi 0, %s22
      %p19 = scmp.ge.s32.totalorder %s18, 4
      %s28 = sphi 0, %s30
      %s31 = sphi 0, %s28
      %s32 = sphi 0, %s31
      %s48 = sphi 0, %s32
      %s52 = sphi 0, %s52
      %s54 = sphi 0, %s52
      %s55 = sphi 0, %s54
      %s69 = sphi 0, %s55
      %s73 = sphi 0, %s73
      %s75 = sphi 0, %s73
      %s76 = sphi 0, %s75
      %s90 = sphi 0, %s76
      %s94 = sphi 0, %s94
      %s96 = sphi 0, %s94
      %s97 = sphi 0, %s96
      %s111 = sphi 0, %s97
      %s115 = sphi 0, %s115
      %s117 = sphi 0, %s115
      %s118 = sphi 0, %s117
      %s132 = sphi 0, %s118
      %s138 = sphi 0, %s140
      %s141 = sphi 0, %s138
      %s142 = sphi 0, %s141
      %s158 = sphi 0, %s142
    $region4: #{tpu_custom_call.1} parent=1 // loop_header_branch
      %21 = sbr.rel (%p19) target = $region8
    $region5: #{tpu_custom_call.1} parent=1 // loop_body
      %s23 = ssub.s32 %s18, 1
      %s24 = ssub.s32 %s18, 2
      %s25 = sadd.s32 %s18, 1
      %s26 = ssub.s32 %s18, %s25
      %p27 = scmp.eq.s32.totalorder %s26, 0
      %s29 = sadd.s32 %s28, 1
      %s30 = scalar_select %p27, %s28, %s29
      %p33 = pneg %p27
      %p34 = scmp.eq.s32.totalorder %s18, 1
      %p35 = por %p33, %p34
      %p36 = scmp.ne.s32.totalorder %s28, %s31
      %p37 = scmp.eq.s32.totalorder %s18, 0
      %p38 = por %p36, %p37
      %p39 = scmp.ne.s32.totalorder %s28, %s31
      %p40 = scmp.eq.s32.totalorder %s23, 1
      %p41 = por %p39, %p40
      %p42 = scmp.ne.s32.totalorder %s31, %s32
      %p43 = scmp.eq.s32.totalorder %s23, 0
      %p44 = por %p42, %p43
      %p45 = scmp.ne.s32.totalorder %s31, %s32
      %p46 = scmp.eq.s32.totalorder %s24, 1
      %p47 = por %p45, %p46
      %p49 = scmp.ne.s32.totalorder %s32, %s48
      %p50 = scmp.eq.s32.totalorder %s24, 0
      %p51 = por %p49, %p50
      %s53 = sadd.s32 %s52, 1
      %p56 = scmp.eq.s32.totalorder %s18, 1
      %p57 = scmp.ne.s32.totalorder %s52, %s54
      %p58 = scmp.eq.s32.totalorder %s18, 0
      %p59 = por %p57, %p58
      %p60 = scmp.ne.s32.totalorder %s52, %s54
      %p61 = scmp.eq.s32.totalorder %s23, 1
      %p62 = por %p60, %p61
      %p63 = scmp.ne.s32.totalorder %s54, %s55
      %p64 = scmp.eq.s32.totalorder %s23, 0
      %p65 = por %p63, %p64
      %p66 = scmp.ne.s32.totalorder %s54, %s55
      %p67 = scmp.eq.s32.totalorder %s24, 1
      %p68 = por %p66, %p67
      %p70 = scmp.ne.s32.totalorder %s55, %s69
      %p71 = scmp.eq.s32.totalorder %s24, 0
      %p72 = por %p70, %p71
      %s74 = sadd.s32 %s73, 1
      %p77 = scmp.eq.s32.totalorder %s18, 1
      %p78 = scmp.ne.s32.totalorder %s73, %s75
      %p79 = scmp.eq.s32.totalorder %s18, 0
      %p80 = por %p78, %p79
      %p81 = scmp.ne.s32.totalorder %s73, %s75
      %p82 = scmp.eq.s32.totalorder %s23, 1
      %p83 = por %p81, %p82
      %p84 = scmp.ne.s32.totalorder %s75, %s76
      %p85 = scmp.eq.s32.totalorder %s23, 0
      %p86 = por %p84, %p85
      %p87 = scmp.ne.s32.totalorder %s75, %s76
      %p88 = scmp.eq.s32.totalorder %s24, 1
      %p89 = por %p87, %p88
      %p91 = scmp.ne.s32.totalorder %s76, %s90
      %p92 = scmp.eq.s32.totalorder %s24, 0
      %p93 = por %p91, %p92
      %s95 = sadd.s32 %s94, 1
      %p98 = scmp.eq.s32.totalorder %s18, 1
      %p99 = scmp.ne.s32.totalorder %s94, %s96
      %p100 = scmp.eq.s32.totalorder %s18, 0
      %p101 = por %p99, %p100
      %p102 = scmp.ne.s32.totalorder %s94, %s96
      %p103 = scmp.eq.s32.totalorder %s23, 1
      %p104 = por %p102, %p103
      %p105 = scmp.ne.s32.totalorder %s96, %s97
      %p106 = scmp.eq.s32.totalorder %s23, 0
      %p107 = por %p105, %p106
      %p108 = scmp.ne.s32.totalorder %s96, %s97
      %p109 = scmp.eq.s32.totalorder %s24, 1
      %p110 = por %p108, %p109
      %p112 = scmp.ne.s32.totalorder %s97, %s111
      %p113 = scmp.eq.s32.totalorder %s24, 0
      %p114 = por %p112, %p113
      %s116 = sadd.s32 %s115, 1
      %p119 = scmp.eq.s32.totalorder %s18, 1
      %p120 = scmp.ne.s32.totalorder %s115, %s117
      %p121 = scmp.eq.s32.totalorder %s18, 0
      %p122 = por %p120, %p121
      %p123 = scmp.ne.s32.totalorder %s115, %s117
      %p124 = scmp.eq.s32.totalorder %s23, 1
      %p125 = por %p123, %p124
      %p126 = scmp.ne.s32.totalorder %s117, %s118
      %p127 = scmp.eq.s32.totalorder %s23, 0
      %p128 = por %p126, %p127
      %p129 = scmp.ne.s32.totalorder %s117, %s118
      %p130 = scmp.eq.s32.totalorder %s24, 1
      %p131 = por %p129, %p130
      %p133 = scmp.ne.s32.totalorder %s118, %s132
      %p134 = scmp.eq.s32.totalorder %s24, 0
      %p135 = por %p133, %p134
      %s136 = ssub.s32 %s18, %s25
      %p137 = scmp.eq.s32.totalorder %s136, 0
      %s139 = sadd.s32 %s138, 1
      %s140 = scalar_select %p137, %s138, %s139
      %p143 = pneg %p137
      %p144 = scmp.eq.s32.totalorder %s18, 1
      %p145 = por %p143, %p144
      %p146 = scmp.ne.s32.totalorder %s138, %s141
      %p147 = scmp.eq.s32.totalorder %s18, 0
      %p148 = por %p146, %p147
      %p149 = scmp.ne.s32.totalorder %s138, %s141
      %p150 = scmp.eq.s32.totalorder %s23, 1
      %p151 = por %p149, %p150
      %p152 = scmp.ne.s32.totalorder %s141, %s142
      %p153 = scmp.eq.s32.totalorder %s23, 0
      %p154 = por %p152, %p153
      %p155 = scmp.ne.s32.totalorder %s141, %s142
      %p156 = scmp.eq.s32.totalorder %s24, 1
      %p157 = por %p155, %p156
      %p159 = scmp.ne.s32.totalorder %s142, %s158
      %p160 = scmp.eq.s32.totalorder %s24, 0
      %p161 = por %p159, %p160
      %p162 = scmp.le.s32.totalorder 1, %s18
      %p163 = scmp.lt.s32.totalorder %s18, 3
      %p164 = pnand %p162, %p163
      %p165 = pneg %p164
      // Predicated region
      $region9: #{tpu_custom_call.1} parent=5 // pred_check
        _
      $region10: #{tpu_custom_call.1} parent=5 // pred_check_branch
        %167 = sbr.rel (%p164) target = $region12
      $region11: #{tpu_custom_call.1} parent=5 // pred_region
        %s168 = ssub.s32 %s18, 1
        // Predicated region
        $region13: #{tpu_custom_call.1} parent=11 // pred_check
          %p169 = pneg %p65
        $region14: #{tpu_custom_call.1} parent=11 // pred_check_branch
          %171 = sbr.rel (%p169) target = $region16
        $region15: #{tpu_custom_call.1} parent=11 // pred_region
          %s173 = ssub.s32 256, 256
          %174 = vsyncadd [#allocation6], %s173
          %s175 = sshll.u32 [#allocation5], 4
          %s176 = int_to_ptr.vmem [resolvable:$true] %s175
          %181 = dma.hbm_to_vmem [thread:$0]  %s1, 256, %s176, [#allocation6], 64, 64, 4
        $region16: #{tpu_custom_call.1} parent=11 // pred_fallthru
          _
        // Predicated region
        $region17: #{tpu_custom_call.1} parent=11 // pred_check
          %p182 = pneg %p86
        $region18: #{tpu_custom_call.1} parent=11 // pred_check_branch
          %184 = sbr.rel (%p182) target = $region20
        $region19: #{tpu_custom_call.1} parent=11 // pred_region
          _
        $region20: #{tpu_custom_call.1} parent=11 // pred_fallthru
          _
        // Predicated region
        $region21: #{tpu_custom_call.1} parent=11 // pred_check
          %p185 = pneg %p107
        $region22: #{tpu_custom_call.1} parent=11 // pred_check_branch
          %187 = sbr.rel (%p185) target = $region24
        $region23: #{tpu_custom_call.1} parent=11 // pred_region
          %s189 = ssub.s32 256, 256
          %190 = vsyncadd [#allocation6], %s189
          %s191 = sshll.u32 [#allocation7], 4
          %s192 = int_to_ptr.vmem [resolvable:$true] %s191
          %197 = dma.hbm_to_vmem [thread:$0]  %s3, 256, %s192, [#allocation6], 64, 64, 4
        $region24: #{tpu_custom_call.1} parent=11 // pred_fallthru
          _
        // Predicated region
        $region25: #{tpu_custom_call.1} parent=11 // pred_check
          %p198 = pneg %p128
        $region26: #{tpu_custom_call.1} parent=11 // pred_check_branch
          %200 = sbr.rel (%p198) target = $region28
        $region27: #{tpu_custom_call.1} parent=11 // pred_region
          _
        $region28: #{tpu_custom_call.1} parent=11 // pred_fallthru
          _
      $region12: #{tpu_custom_call.1} parent=5 // pred_fallthru
        _
      %p201 = scmp.lt.s32.totalorder %s18, 2
      // Predicated region
      $region29: #{tpu_custom_call.1} parent=5 // pred_check
        %p202 = pneg %p201
      $region30: #{tpu_custom_call.1} parent=5 // pred_check_branch
        %204 = sbr.rel (%p202) target = $region32
      $region31: #{tpu_custom_call.1} parent=5 // pred_region
        // Predicated region
        $region33: #{tpu_custom_call.1} parent=31 // pred_check
          %p205 = pneg %p38
        $region34: #{tpu_custom_call.1} parent=31 // pred_check_branch
          %207 = sbr.rel (%p205) target = $region36
        $region35: #{tpu_custom_call.1} parent=31 // pred_region
          %s208 = sand.u32 %s28, 1
          %s209 = scalar_lea.sflag [#allocation3], %s208
          %s210 = sand.u32 %s28, 1
          %s211 = smul.addr %s210, 8
          %s212 = scalar_lea.vmem [#allocation2], %s211
          %s214 = ssub.s32 128, 128
          %215 = vsyncadd %s209, %s214
          %s216 = smul.addr %s18, 128
          %s217 = scalar_lea.hbm %s0, %s216
          %s219 = sshll.u32 %s212, 4
          %s220 = int_to_ptr.vmem [resolvable:$true] %s219
          %222 = dma.hbm_to_vmem [thread:$0]  %s217, 128, %s220, %s209
        $region36: #{tpu_custom_call.1} parent=31 // pred_fallthru
          _
      $region32: #{tpu_custom_call.1} parent=5 // pred_fallthru
        _
      %p223 = scmp.le.s32.totalorder 1, %s18
      %p224 = scmp.lt.s32.totalorder %s18, 3
      %p225 = pnand %p223, %p224
      %p226 = pneg %p225
      // Predicated region
      $region37: #{tpu_custom_call.1} parent=5 // pred_check
        _
      $region38: #{tpu_custom_call.1} parent=5 // pred_check_branch
        %228 = sbr.rel (%p225) target = $region40
      $region39: #{tpu_custom_call.1} parent=5 // pred_region
        %s229 = ssub.s32 %s18, 1
        %s230 = sand.u32 %s31, 1
        %s231 = scalar_lea.sflag [#allocation3], %s230
        %s232 = sand.u32 %s31, 1
        %s233 = smul.addr %s232, 8
        %s234 = scalar_lea.vmem [#allocation2], %s233
        // Predicated region
        $region41: #{tpu_custom_call.1} parent=39 // pred_check
          %p235 = pneg %p44
        $region42: #{tpu_custom_call.1} parent=39 // pred_check_branch
          %237 = sbr.rel (%p235) target = $region44
        $region43: #{tpu_custom_call.1} parent=39 // pred_region
          %238 = dma.done %s231, 128
        $region44: #{tpu_custom_call.1} parent=39 // pred_fallthru
          _
        // Predicated region
        $region45: #{tpu_custom_call.1} parent=39 // pred_check
          %p239 = pneg %p65
        $region46: #{tpu_custom_call.1} parent=39 // pred_check_branch
          %241 = sbr.rel (%p239) target = $region48
        $region47: #{tpu_custom_call.1} parent=39 // pred_region
          %242 = dma.done [#allocation6], 256
        $region48: #{tpu_custom_call.1} parent=39 // pred_fallthru
          _
        // Predicated region
        $region49: #{tpu_custom_call.1} parent=39 // pred_check
          %p243 = pneg %p107
        $region50: #{tpu_custom_call.1} parent=39 // pred_check_branch
          %245 = sbr.rel (%p243) target = $region52
        $region51: #{tpu_custom_call.1} parent=39 // pred_region
          %246 = dma.done [#allocation6], 256
        $region52: #{tpu_custom_call.1} parent=39 // pred_fallthru
          _
        %s247 = sand.u32 %s31, 1
        %s248 = scalar_lea.sflag [#allocation3], %s247
        %s249 = sand.u32 %s31, 1
        %s250 = smul.addr %s249, 8
        %s251 = scalar_lea.vmem [#allocation2], %s250
        %p252 = pneg %p44
        %p253 = pneg %p41
        %p254 = pneg %p65
        %p255 = pneg %p62
        %p256 = pneg %p86
        %p257 = pneg %p83
        %p258 = pneg %p107
        %p259 = pneg %p104
        %p260 = pneg %p128
        %p261 = pneg %p125
        %p262 = pneg %p154
        %p263 = pneg %p151
        %s264 = sand.u32 %s141, 1
        %s265 = scalar_lea.sflag [#allocation4], %s264
        %s266 = sand.u32 %s141, 1
        %s267 = smul.addr %s266, 8
        %s268 = scalar_lea.vmem [#allocation8], %s267
        %v270 = vld [vmem:[%s234] sm:$0xff]
        %v271 = vpack.c.bf16 %v270, %v270
        %v272 = vld [vmem:[#allocation5] sm:$0xf]
        %v273 = vld [vmem:[#allocation5 + $0x4] sm:$0xf]
        %v274 = vld [vmem:[#allocation5 + $0x8] sm:$0xf]
        %v275 = vld [vmem:[#allocation5 + $0xc] sm:$0xf]
        %v276 = vld [vmem:[%s2] sm:$0x1]
        %v278 = vlaneseq
        %v279 = vshrl.u32 %v278, 7
        %v280 = vsub.s32 0, %v279
        %v281 = vrot.slane %v276, %v280
        %v287 = vunpack.c.l.b16 %v272
        %v288 = vunpack.c.l.b16 %v273
        %v289 = vunpack.c.l.b16 %v274
        %v290 = vunpack.c.l.b16 %v275
        %v291 = vpack.c.b16 %v288, %v287
        %v292 = vpack.c.b16 %v290, %v289
        %vm295 = vcmask 261120
        %v297 = vsel %vm295, %v271, 0
        %299 = vmatprep.subr.bf16.mxu0 0
        %300 = vmatpush1.bf16.msra.mxu0 %v291
        %301 = vmatprep.subr.bf16.mxu0 0
        %302 = vmatpush1.bf16.msra.mxu0 %v292
        %303 = vmatprep.subr.bf16.mxu0 0
        %304 = vmatpush1.bf16.msra.mxu0 0
        %305 = vmatprep.subr.bf16.mxu0 0
        %306 = vmatpush1.bf16.msra.mxu0 0
        %307 = vmatprep.subr.bf16.mxu0 0
        %308 = vmatpush1.bf16.msra.mxu0 0
        %309 = vmatprep.subr.bf16.mxu0 0
        %310 = vmatpush1.bf16.msra.mxu0 0
        %311 = vmatprep.subr.bf16.mxu0 0
        %312 = vmatpush1.bf16.msra.mxu0 0
        %313 = vmatprep.subr.bf16.mxu0 0
        %314 = vmatpush1.bf16.msra.mxu0 0
        %315 = vmatprep.subr.bf16.mxu0 0
        %316 = vmatpush1.bf16.msra.mxu0 0
        %317 = vmatprep.subr.bf16.mxu0 0
        %318 = vmatpush1.bf16.msra.mxu0 0
        %319 = vmatprep.subr.bf16.mxu0 0
        %320 = vmatpush1.bf16.msra.mxu0 0
        %321 = vmatprep.subr.bf16.mxu0 0
        %322 = vmatpush1.bf16.msra.mxu0 0
        %323 = vmatprep.subr.bf16.mxu0 0
        %324 = vmatpush1.bf16.msra.mxu0 0
        %325 = vmatprep.subr.bf16.mxu0 0
        %326 = vmatpush1.bf16.msra.mxu0 0
        %327 = vmatprep.subr.bf16.mxu0 0
        %328 = vmatpush1.bf16.msra.mxu0 0
        %329 = vmatprep.subr.bf16.mxu0 0
        %330 = vmatpush1.bf16.msra.mxu0 0
        %331 = vmatprep.mubr.bf16.mxu0 0
        %332 = vmatmul.mubr.bf16.gmra.mrb[0].mxu0 %v297
        %v333 = vpop.f32.mrb[0].mxu0
        %v334 = vadd.f32 %v281, %v333
        %v335 = vpop.f32.mrb[0].mxu0
        %v336 = vpop.f32.mrb[0].mxu0
        %v337 = vpop.f32.mrb[0].mxu0
        %338 = vdwg.mxu0
        %v339 = vpack.c.bf16 %v334, %v334
        %341 = vrot.lane.b32.xlu0 %v339, 120
        %v342 = vpop.permute.xlu0 %341
        %344 = vrot.lane.b32.xlu0 %v339, 112
        %v345 = vpop.permute.xlu0 %344
        %347 = vrot.lane.b32.xlu0 %v339, 104
        %v348 = vpop.permute.xlu0 %347
        %350 = vrot.lane.b32.xlu0 %v339, 96
        %v351 = vpop.permute.xlu0 %350
        %353 = vrot.lane.b32.xlu0 %v339, 88
        %v354 = vpop.permute.xlu0 %353
        %356 = vrot.lane.b32.xlu0 %v339, 80
        %v357 = vpop.permute.xlu0 %356
        %359 = vrot.lane.b32.xlu0 %v339, 72
        %v360 = vpop.permute.xlu0 %359
        %362 = vrot.lane.b32.xlu0 %v339, 64
        %v363 = vpop.permute.xlu0 %362
        %364 = vrot.lane.b32.xlu0 %v339, 56
        %v365 = vpop.permute.xlu0 %364
        %366 = vrot.lane.b32.xlu0 %v339, 48
        %v367 = vpop.permute.xlu0 %366
        %368 = vrot.lane.b32.xlu0 %v339, 40
        %v369 = vpop.permute.xlu0 %368
        %v370 = vcombine.low %v339, %v351
        %v372 = vunpack.c.l.s4 1983009808
        %v373 = vunpack.c.0.s8 %v372
        %v374 = vlaneseq
        %v375 = vshrl.u32 %v374, 7
        %v376 = vsub.s32 %v373, %v375
        %v377 = vrot.slane %v370, %v376
        %v378 = vcombine.low %v345, %v357
        %v380 = vunpack.c.l.s4 1983009808
        %v381 = vunpack.c.0.s8 %v380
        %v382 = vlaneseq
        %v383 = vshrl.u32 %v382, 7
        %v384 = vsub.s32 %v381, %v383
        %v385 = vrot.slane %v378, %v384
        %v388 = vunpack.c.l.s4 1983009808
        %v389 = vunpack.c.0.s8 %v388
        %v390 = vlaneseq
        %v391 = vshrl.u32 %v390, 7
        %v392 = vsub.s32 %v389, %v391
        %v393 = vrot.slane %v363, %v392
        %v396 = vunpack.c.l.s4 1983009808
        %v397 = vunpack.c.0.s8 %v396
        %v398 = vlaneseq
        %v399 = vshrl.u32 %v398, 7
        %v400 = vsub.s32 %v397, %v399
        %v401 = vrot.slane %v367, %v400
        %v402 = vcombine.low %v377, %v385
        %v403 = vcombine.high %v377, %v385
        %v405 = vunpack.c.l.s4 1934713408
        %v406 = vunpack.c.0.s8 %v405
        %v407 = vlaneseq
        %v408 = vshrl.u32 %v407, 7
        %v409 = vsub.s32 %v406, %v408
        %v410 = vrot.slane %v402, %v409
        %v412 = vunpack.c.l.s4 1934713408
        %v413 = vunpack.c.0.s8 %v412
        %v414 = vlaneseq
        %v415 = vshrl.u32 %v414, 7
        %v416 = vsub.s32 %v413, %v415
        %v417 = vrot.slane %v403, %v416
        %v418 = vcombine.low %v393, %v401
        %v419 = vcombine.high %v393, %v401
        %v421 = vunpack.c.l.s4 1934713408
        %v422 = vunpack.c.0.s8 %v421
        %v423 = vlaneseq
        %v424 = vshrl.u32 %v423, 7
        %v425 = vsub.s32 %v422, %v424
        %v426 = vrot.slane %v418, %v425
        %v428 = vunpack.c.l.s4 1934713408
        %v429 = vunpack.c.0.s8 %v428
        %v430 = vlaneseq
        %v431 = vshrl.u32 %v430, 7
        %v432 = vsub.s32 %v429, %v431
        %v433 = vrot.slane %v419, %v432
        %v434 = vcombine.low %v410, %v426
        %v435 = vcombine.high %v410, %v426
        %v436 = vcombine.low %v417, %v433
        %v437 = vcombine.high %v417, %v433
        %v438 = vcombine.low %v342, %v354
        %v440 = vunpack.c.l.s4 1983009808
        %v441 = vunpack.c.0.s8 %v440
        %v442 = vlaneseq
        %v443 = vshrl.u32 %v442, 7
        %v444 = vsub.s32 %v441, %v443
        %v445 = vrot.slane %v438, %v444
        %v446 = vcombine.low %v348, %v360
        %v448 = vunpack.c.l.s4 1983009808
        %v449 = vunpack.c.0.s8 %v448
        %v450 = vlaneseq
        %v451 = vshrl.u32 %v450, 7
        %v452 = vsub.s32 %v449, %v451
        %v453 = vrot.slane %v446, %v452
        %v456 = vunpack.c.l.s4 1983009808
        %v457 = vunpack.c.0.s8 %v456
        %v458 = vlaneseq
        %v459 = vshrl.u32 %v458, 7
        %v460 = vsub.s32 %v457, %v459
        %v461 = vrot.slane %v365, %v460
        %v464 = vunpack.c.l.s4 1983009808
        %v465 = vunpack.c.0.s8 %v464
        %v466 = vlaneseq
        %v467 = vshrl.u32 %v466, 7
        %v468 = vsub.s32 %v465, %v467
        %v469 = vrot.slane %v369, %v468
        %v470 = vcombine.low %v445, %v453
        %v471 = vcombine.high %v445, %v453
        %v473 = vunpack.c.l.s4 1934713408
        %v474 = vunpack.c.0.s8 %v473
        %v475 = vlaneseq
        %v476 = vshrl.u32 %v475, 7
        %v477 = vsub.s32 %v474, %v476
        %v478 = vrot.slane %v470, %v477
        %v480 = vunpack.c.l.s4 1934713408
        %v481 = vunpack.c.0.s8 %v480
        %v482 = vlaneseq
        %v483 = vshrl.u32 %v482, 7
        %v484 = vsub.s32 %v481, %v483
        %v485 = vrot.slane %v471, %v484
        %v486 = vcombine.low %v461, %v469
        %v487 = vcombine.high %v461, %v469
        %v489 = vunpack.c.l.s4 1934713408
        %v490 = vunpack.c.0.s8 %v489
        %v491 = vlaneseq
        %v492 = vshrl.u32 %v491, 7
        %v493 = vsub.s32 %v490, %v492
        %v494 = vrot.slane %v486, %v493
        %v496 = vunpack.c.l.s4 1934713408
        %v497 = vunpack.c.0.s8 %v496
        %v498 = vlaneseq
        %v499 = vshrl.u32 %v498, 7
        %v500 = vsub.s32 %v497, %v499
        %v501 = vrot.slane %v487, %v500
        %v502 = vcombine.low %v478, %v494
        %v503 = vcombine.high %v478, %v494
        %v504 = vcombine.low %v485, %v501
        %v505 = vcombine.high %v485, %v501
        %v508 = vpack.i.b16 %v502, %v434
        %v510 = vshrl.u32 %v434, 16
        %v511 = vshrl.u32 %v502, 16
        %v512 = vpack.i.b16 %v511, %v510
        %v516 = vpack.i.b16 %v503, %v435
        %v518 = vshrl.u32 %v435, 16
        %v519 = vshrl.u32 %v503, 16
        %v520 = vpack.i.b16 %v519, %v518
        %v524 = vpack.i.b16 %v504, %v436
        %v526 = vshrl.u32 %v436, 16
        %v527 = vshrl.u32 %v504, 16
        %v528 = vpack.i.b16 %v527, %v526
        %v532 = vpack.i.b16 %v505, %v437
        %v534 = vshrl.u32 %v437, 16
        %v535 = vshrl.u32 %v505, 16
        %v536 = vpack.i.b16 %v535, %v534
        %v538 = vcombine.low %v508, %v524
        %v539 = vcombine.high %v508, %v524
        %v541 = vunpack.c.l.s4 1983009808
        %v542 = vunpack.c.0.s8 %v541
        %v543 = vlaneseq
        %v544 = vshrl.u32 %v543, 7
        %v545 = vsub.s32 %v542, %v544
        %v546 = vrot.slane %v538, %v545
        %v548 = vunpack.c.l.s4 1983009808
        %v549 = vunpack.c.0.s8 %v548
        %v550 = vlaneseq
        %v551 = vshrl.u32 %v550, 7
        %v552 = vsub.s32 %v549, %v551
        %v553 = vrot.slane %v539, %v552
        %v554 = vcombine.low %v516, %v532
        %v555 = vcombine.high %v516, %v532
        %v557 = vunpack.c.l.s4 1983009808
        %v558 = vunpack.c.0.s8 %v557
        %v559 = vlaneseq
        %v560 = vshrl.u32 %v559, 7
        %v561 = vsub.s32 %v558, %v560
        %v562 = vrot.slane %v554, %v561
        %v564 = vunpack.c.l.s4 1983009808
        %v565 = vunpack.c.0.s8 %v564
        %v566 = vlaneseq
        %v567 = vshrl.u32 %v566, 7
        %v568 = vsub.s32 %v565, %v567
        %v569 = vrot.slane %v555, %v568
        %v570 = vcombine.low %v546, %v562
        %v571 = vcombine.high %v546, %v562
        %v573 = vunpack.c.l.s4 1934713408
        %v574 = vunpack.c.0.s8 %v573
        %v575 = vlaneseq
        %v576 = vshrl.u32 %v575, 7
        %v577 = vsub.s32 %v574, %v576
        %v578 = vrot.slane %v570, %v577
        %v580 = vunpack.c.l.s4 1934713408
        %v581 = vunpack.c.0.s8 %v580
        %v582 = vlaneseq
        %v583 = vshrl.u32 %v582, 7
        %v584 = vsub.s32 %v581, %v583
        %v585 = vrot.slane %v571, %v584
        %v586 = vcombine.low %v553, %v569
        %v588 = vunpack.c.l.s4 1934713408
        %v589 = vunpack.c.0.s8 %v588
        %v590 = vlaneseq
        %v591 = vshrl.u32 %v590, 7
        %v592 = vsub.s32 %v589, %v591
        %v593 = vrot.slane %v586, %v592
        %v594 = vcombine.high %v578, 0
        %v595 = vcombine.high %v585, 0
        %v596 = vcombine.high %v593, 0
        %v597 = vcombine.low %v512, %v528
        %v598 = vcombine.high %v512, %v528
        %v600 = vunpack.c.l.s4 1983009808
        %v601 = vunpack.c.0.s8 %v600
        %v602 = vlaneseq
        %v603 = vshrl.u32 %v602, 7
        %v604 = vsub.s32 %v601, %v603
        %v605 = vrot.slane %v597, %v604
        %v607 = vunpack.c.l.s4 1983009808
        %v608 = vunpack.c.0.s8 %v607
        %v609 = vlaneseq
        %v610 = vshrl.u32 %v609, 7
        %v611 = vsub.s32 %v608, %v610
        %v612 = vrot.slane %v598, %v611
        %v613 = vcombine.low %v520, %v536
        %v614 = vcombine.high %v520, %v536
        %v616 = vunpack.c.l.s4 1983009808
        %v617 = vunpack.c.0.s8 %v616
        %v618 = vlaneseq
        %v619 = vshrl.u32 %v618, 7
        %v620 = vsub.s32 %v617, %v619
        %v621 = vrot.slane %v613, %v620
        %v623 = vunpack.c.l.s4 1983009808
        %v624 = vunpack.c.0.s8 %v623
        %v625 = vlaneseq
        %v626 = vshrl.u32 %v625, 7
        %v627 = vsub.s32 %v624, %v626
        %v628 = vrot.slane %v614, %v627
        %v629 = vcombine.low %v605, %v621
        %v630 = vcombine.high %v605, %v621
        %v632 = vunpack.c.l.s4 1934713408
        %v633 = vunpack.c.0.s8 %v632
        %v634 = vlaneseq
        %v635 = vshrl.u32 %v634, 7
        %v636 = vsub.s32 %v633, %v635
        %v637 = vrot.slane %v629, %v636
        %v639 = vunpack.c.l.s4 1934713408
        %v640 = vunpack.c.0.s8 %v639
        %v641 = vlaneseq
        %v642 = vshrl.u32 %v641, 7
        %v643 = vsub.s32 %v640, %v642
        %v644 = vrot.slane %v630, %v643
        %v645 = vcombine.low %v612, %v628
        %v647 = vunpack.c.l.s4 1934713408
        %v648 = vunpack.c.0.s8 %v647
        %v649 = vlaneseq
        %v650 = vshrl.u32 %v649, 7
        %v651 = vsub.s32 %v648, %v650
        %v652 = vrot.slane %v645, %v651
        %v653 = vcombine.high %v637, 0
        %v654 = vcombine.high %v644, 0
        %v655 = vcombine.high %v652, 0
        %v658 = vpack.i.b16 %v637, %v578
        %v659 = vshrl.u32 %v578, 16
        %v660 = vshrl.u32 %v637, 16
        %v661 = vpack.i.b16 %v660, %v659
        %v664 = vpack.i.b16 %v653, %v594
        %v665 = vshrl.u32 %v594, 16
        %v666 = vshrl.u32 %v653, 16
        %v667 = vpack.i.b16 %v666, %v665
        %v670 = vpack.i.b16 %v644, %v585
        %v671 = vshrl.u32 %v585, 16
        %v672 = vshrl.u32 %v644, 16
        %v673 = vpack.i.b16 %v672, %v671
        %v676 = vpack.i.b16 %v654, %v595
        %v677 = vshrl.u32 %v595, 16
        %v678 = vshrl.u32 %v654, 16
        %v679 = vpack.i.b16 %v678, %v677
        %v682 = vpack.i.b16 %v652, %v593
        %v683 = vshrl.u32 %v593, 16
        %v684 = vshrl.u32 %v652, 16
        %v685 = vpack.i.b16 %v684, %v683
        %v688 = vpack.i.b16 %v655, %v596
        %v689 = vshrl.u32 %v596, 16
        %v690 = vshrl.u32 %v655, 16
        %v691 = vpack.i.b16 %v690, %v689
        %vm692 = vcmask 64512
        %v694 = vsel %vm692, %v658, 0
        %v697 = vsel %vm692, %v670, 0
        %699 = vmatprep.subr.bf16.mxu0 0
        %700 = vmatpush1.bf16.xpose.msra.mxu0 %v697
        %701 = vmatprep.subr.bf16.mxu0 0
        %702 = vmatpush1.bf16.xpose.msra.mxu0 0
        %703 = vmatprep.subr.bf16.mxu0 0
        %704 = vmatpush1.bf16.xpose.msra.mxu0 0
        %705 = vmatprep.subr.bf16.mxu0 0
        %706 = vmatpush1.bf16.xpose.msra.mxu0 0
        %707 = vmatprep.subr.bf16.mxu0 0
        %708 = vmatpush1.bf16.xpose.msra.mxu0 0
        %709 = vmatprep.subr.bf16.mxu0 0
        %710 = vmatpush1.bf16.xpose.msra.mxu0 0
        %711 = vmatprep.subr.bf16.mxu0 0
        %712 = vmatpush1.bf16.xpose.msra.mxu0 0
        %713 = vmatprep.subr.bf16.mxu0 0
        %714 = vmatpush1.bf16.xpose.msra.mxu0 0
        %715 = vmatprep.subr.bf16.mxu0 0
        %716 = vmatpush1.bf16.xpose.msra.mxu0 0
        %717 = vmatprep.subr.bf16.mxu0 0
        %718 = vmatpush1.bf16.xpose.msra.mxu0 0
        %719 = vmatprep.subr.bf16.mxu0 0
        %720 = vmatpush1.bf16.xpose.msra.mxu0 0
        %721 = vmatprep.subr.bf16.mxu0 0
        %722 = vmatpush1.bf16.xpose.msra.mxu0 0
        %723 = vmatprep.subr.bf16.mxu0 0
        %724 = vmatpush1.bf16.xpose.msra.mxu0 0
        %725 = vmatprep.subr.bf16.mxu0 0
        %726 = vmatpush1.bf16.xpose.msra.mxu0 0
        %727 = vmatprep.subr.bf16.mxu0 0
        %728 = vmatpush1.bf16.xpose.msra.mxu0 0
        %729 = vmatprep.subr.bf16.mxu0 0
        %730 = vmatpush1.bf16.xpose.msra.mxu0 0
        %731 = vmatprep.mubr.bf16.mxu0 0
        %732 = vmatmul.mubr.bf16.gmra.mrb[0].mxu0 %v694
        %v733 = vpop.f32.mrb[0].mxu0
        %v734 = vadd.f32 0.0, %v733
        %v735 = vpop.f32.mrb[0].mxu0
        %v736 = vpop.f32.mrb[0].mxu0
        %v737 = vpop.f32.mrb[0].mxu0
        %738 = vdwg.mxu0
        %v740 = vsel %vm692, %v661, 0
        %v743 = vsel %vm692, %v673, 0
        %745 = vmatprep.subr.bf16.mxu0 0
        %746 = vmatpush1.bf16.xpose.msra.mxu0 %v743
        %747 = vmatprep.subr.bf16.mxu0 0
        %748 = vmatpush1.bf16.xpose.msra.mxu0 0
        %749 = vmatprep.subr.bf16.mxu0 0
        %750 = vmatpush1.bf16.xpose.msra.mxu0 0
        %751 = vmatprep.subr.bf16.mxu0 0
        %752 = vmatpush1.bf16.xpose.msra.mxu0 0
        %753 = vmatprep.subr.bf16.mxu0 0
        %754 = vmatpush1.bf16.xpose.msra.mxu0 0
        %755 = vmatprep.subr.bf16.mxu0 0
        %756 = vmatpush1.bf16.xpose.msra.mxu0 0
        %757 = vmatprep.subr.bf16.mxu0 0
        %758 = vmatpush1.bf16.xpose.msra.mxu0 0
        %759 = vmatprep.subr.bf16.mxu0 0
        %760 = vmatpush1.bf16.xpose.msra.mxu0 0
        %761 = vmatprep.subr.bf16.mxu0 0
        %762 = vmatpush1.bf16.xpose.msra.mxu0 0
        %763 = vmatprep.subr.bf16.mxu0 0
        %764 = vmatpush1.bf16.xpose.msra.mxu0 0
        %765 = vmatprep.subr.bf16.mxu0 0
        %766 = vmatpush1.bf16.xpose.msra.mxu0 0
        %767 = vmatprep.subr.bf16.mxu0 0
        %768 = vmatpush1.bf16.xpose.msra.mxu0 0
        %769 = vmatprep.subr.bf16.mxu0 0
        %770 = vmatpush1.bf16.xpose.msra.mxu0 0
        %771 = vmatprep.subr.bf16.mxu0 0
        %772 = vmatpush1.bf16.xpose.msra.mxu0 0
        %773 = vmatprep.subr.bf16.mxu0 0
        %774 = vmatpush1.bf16.xpose.msra.mxu0 0
        %775 = vmatprep.subr.bf16.mxu0 0
        %776 = vmatpush1.bf16.xpose.msra.mxu0 0
        %777 = vmatprep.mubr.bf16.mxu0 0
        %778 = vmatmul.mubr.bf16.gmra.mrb[0].mxu0 %v740
        %v779 = vpop.f32.mrb[0].mxu0
        %v780 = vadd.f32 0.0, %v779
        %v781 = vpop.f32.mrb[0].mxu0
        %v782 = vpop.f32.mrb[0].mxu0
        %v783 = vpop.f32.mrb[0].mxu0
        %784 = vdwg.mxu0
        %v786 = vsel %vm692, %v664, 0
        %v789 = vsel %vm692, %v676, 0
        %791 = vmatprep.subr.bf16.mxu0 0
        %792 = vmatpush1.bf16.xpose.msra.mxu0 %v789
        %793 = vmatprep.subr.bf16.mxu0 0
        %794 = vmatpush1.bf16.xpose.msra.mxu0 0
        %795 = vmatprep.subr.bf16.mxu0 0
        %796 = vmatpush1.bf16.xpose.msra.mxu0 0
        %797 = vmatprep.subr.bf16.mxu0 0
        %798 = vmatpush1.bf16.xpose.msra.mxu0 0
        %799 = vmatprep.subr.bf16.mxu0 0
        %800 = vmatpush1.bf16.xpose.msra.mxu0 0
        %801 = vmatprep.subr.bf16.mxu0 0
        %802 = vmatpush1.bf16.xpose.msra.mxu0 0
        %803 = vmatprep.subr.bf16.mxu0 0
        %804 = vmatpush1.bf16.xpose.msra.mxu0 0
        %805 = vmatprep.subr.bf16.mxu0 0
        %806 = vmatpush1.bf16.xpose.msra.mxu0 0
        %807 = vmatprep.subr.bf16.mxu0 0
        %808 = vmatpush1.bf16.xpose.msra.mxu0 0
        %809 = vmatprep.subr.bf16.mxu0 0
        %810 = vmatpush1.bf16.xpose.msra.mxu0 0
        %811 = vmatprep.subr.bf16.mxu0 0
        %812 = vmatpush1.bf16.xpose.msra.mxu0 0
        %813 = vmatprep.subr.bf16.mxu0 0
        %814 = vmatpush1.bf16.xpose.msra.mxu0 0
        %815 = vmatprep.subr.bf16.mxu0 0
        %816 = vmatpush1.bf16.xpose.msra.mxu0 0
        %817 = vmatprep.subr.bf16.mxu0 0
        %818 = vmatpush1.bf16.xpose.msra.mxu0 0
        %819 = vmatprep.subr.bf16.mxu0 0
        %820 = vmatpush1.bf16.xpose.msra.mxu0 0
        %821 = vmatprep.subr.bf16.mxu0 0
        %822 = vmatpush1.bf16.xpose.msra.mxu0 0
        %823 = vmatprep.mubr.bf16.mxu0 0
        %824 = vmatmul.mubr.bf16.gmra.mrb[0].mxu0 %v786
        %v825 = vpop.f32.mrb[0].mxu0
        %v826 = vadd.f32 0.0, %v825
        %v827 = vpop.f32.mrb[0].mxu0
        %v828 = vpop.f32.mrb[0].mxu0
        %v829 = vpop.f32.mrb[0].mxu0
        %830 = vdwg.mxu0
        %v832 = vsel %vm692, %v667, 0
        %v835 = vsel %vm692, %v679, 0
        %837 = vmatprep.subr.bf16.mxu0 0
        %838 = vmatpush1.bf16.xpose.msra.mxu0 %v835
        %839 = vmatprep.subr.bf16.mxu0 0
        %840 = vmatpush1.bf16.xpose.msra.mxu0 0
        %841 = vmatprep.subr.bf16.mxu0 0
        %842 = vmatpush1.bf16.xpose.msra.mxu0 0
        %843 = vmatprep.subr.bf16.mxu0 0
        %844 = vmatpush1.bf16.xpose.msra.mxu0 0
        %845 = vmatprep.subr.bf16.mxu0 0
        %846 = vmatpush1.bf16.xpose.msra.mxu0 0
        %847 = vmatprep.subr.bf16.mxu0 0
        %848 = vmatpush1.bf16.xpose.msra.mxu0 0
        %849 = vmatprep.subr.bf16.mxu0 0
        %850 = vmatpush1.bf16.xpose.msra.mxu0 0
        %851 = vmatprep.subr.bf16.mxu0 0
        %852 = vmatpush1.bf16.xpose.msra.mxu0 0
        %853 = vmatprep.subr.bf16.mxu0 0
        %854 = vmatpush1.bf16.xpose.msra.mxu0 0
        %855 = vmatprep.subr.bf16.mxu0 0
        %856 = vmatpush1.bf16.xpose.msra.mxu0 0
        %857 = vmatprep.subr.bf16.mxu0 0
        %858 = vmatpush1.bf16.xpose.msra.mxu0 0
        %859 = vmatprep.subr.bf16.mxu0 0
        %860 = vmatpush1.bf16.xpose.msra.mxu0 0
        %861 = vmatprep.subr.bf16.mxu0 0
        %862 = vmatpush1.bf16.xpose.msra.mxu0 0
        %863 = vmatprep.subr.bf16.mxu0 0
        %864 = vmatpush1.bf16.xpose.msra.mxu0 0
        %865 = vmatprep.subr.bf16.mxu0 0
        %866 = vmatpush1.bf16.xpose.msra.mxu0 0
        %867 = vmatprep.subr.bf16.mxu0 0
        %868 = vmatpush1.bf16.xpose.msra.mxu0 0
        %869 = vmatprep.mubr.bf16.mxu0 0
        %870 = vmatmul.mubr.bf16.gmra.mrb[0].mxu0 %v832
        %v871 = vpop.f32.mrb[0].mxu0
        %v872 = vadd.f32 0.0, %v871
        %v873 = vpop.f32.mrb[0].mxu0
        %v874 = vpop.f32.mrb[0].mxu0
        %v875 = vpop.f32.mrb[0].mxu0
        %876 = vdwg.mxu0
        %v877 = vsel %vm692, %v734, -inf
        %878 = vmax.xlane.f32.xlu0 %v877
        %v879 = vpop.xlane.xlu0 %878
        %v880 = vsel %vm692, %v780, -inf
        %881 = vmax.xlane.f32.xlu0 %v880
        %v882 = vpop.xlane.xlu0 %881
        %v883 = vsel %vm692, %v826, -inf
        %884 = vmax.xlane.f32.xlu0 %v883
        %v885 = vpop.xlane.xlu0 %884
        %v886 = vsel %vm692, %v872, -inf
        %887 = vmax.xlane.f32.xlu0 %v886
        %v888 = vpop.xlane.xlu0 %887
        %v889 = vsub.f32 %v734, %v879
        %v890 = vsub.f32 %v780, %v882
        %v891 = vsub.f32 %v826, %v885
        %v892 = vsub.f32 %v872, %v888
        %v893 = vmul.f32 %v889, 1.442695
        %v894 = vpow.pop %v893
        %v895 = vmul.f32 %v890, 1.442695
        %v896 = vpow.pop %v895
        %v897 = vmul.f32 %v891, 1.442695
        %v898 = vpow.pop %v897
        %v899 = vmul.f32 %v892, 1.442695
        %v900 = vpow.pop %v899
        %v901 = vsel %vm692, %v894, 0.0
        %902 = vadd.xlane.f32.xlu0 %v901
        %v903 = vpop.xlane.xlu0 %902
        %v904 = vsel %vm692, %v896, 0.0
        %905 = vadd.xlane.f32.xlu0 %v904
        %v906 = vpop.xlane.xlu0 %905
        %v907 = vsel %vm692, %v898, 0.0
        %908 = vadd.xlane.f32.xlu0 %v907
        %v909 = vpop.xlane.xlu0 %908
        %v910 = vsel %vm692, %v900, 0.0
        %911 = vadd.xlane.f32.xlu0 %v910
        %v912 = vpop.xlane.xlu0 %911
        %v913 = vrcp.pop %v903
        %v914 = vrcp.pop %v906
        %v915 = vrcp.pop %v909
        %v916 = vrcp.pop %v912
        %v917 = vmul.f32 %v894, %v913
        %v918 = vmul.f32 %v896, %v914
        %v919 = vmul.f32 %v898, %v915
        %v920 = vmul.f32 %v900, %v916
        %v921 = vpack.c.bf16 %v917, %v917
        %v922 = vpack.c.bf16 %v918, %v918
        %v923 = vpack.c.bf16 %v919, %v919
        %v924 = vpack.c.bf16 %v920, %v920
        %v926 = vsel %vm692, %v921, 0
        %vm928 = vcmask 1043456
        %v930 = vsel %vm928, %v682, 0
        %932 = vmatprep.subr.bf16.mxu0 0
        %933 = vmatpush1.bf16.msra.mxu0 %v930
        %934 = vmatprep.subr.bf16.mxu0 0
        %935 = vmatpush1.bf16.msra.mxu0 0
        %936 = vmatprep.subr.bf16.mxu0 0
        %937 = vmatpush1.bf16.msra.mxu0 0
        %938 = vmatprep.subr.bf16.mxu0 0
        %939 = vmatpush1.bf16.msra.mxu0 0
        %940 = vmatprep.subr.bf16.mxu0 0
        %941 = vmatpush1.bf16.msra.mxu0 0
        %942 = vmatprep.subr.bf16.mxu0 0
        %943 = vmatpush1.bf16.msra.mxu0 0
        %944 = vmatprep.subr.bf16.mxu0 0
        %945 = vmatpush1.bf16.msra.mxu0 0
        %946 = vmatprep.subr.bf16.mxu0 0
        %947 = vmatpush1.bf16.msra.mxu0 0
        %948 = vmatprep.subr.bf16.mxu0 0
        %949 = vmatpush1.bf16.msra.mxu0 0
        %950 = vmatprep.subr.bf16.mxu0 0
        %951 = vmatpush1.bf16.msra.mxu0 0
        %952 = vmatprep.subr.bf16.mxu0 0
        %953 = vmatpush1.bf16.msra.mxu0 0
        %954 = vmatprep.subr.bf16.mxu0 0
        %955 = vmatpush1.bf16.msra.mxu0 0
        %956 = vmatprep.subr.bf16.mxu0 0
        %957 = vmatpush1.bf16.msra.mxu0 0
        %958 = vmatprep.subr.bf16.mxu0 0
        %959 = vmatpush1.bf16.msra.mxu0 0
        %960 = vmatprep.subr.bf16.mxu0 0
        %961 = vmatpush1.bf16.msra.mxu0 0
        %962 = vmatprep.subr.bf16.mxu0 0
        %963 = vmatpush1.bf16.msra.mxu0 0
        %964 = vmatprep.mubr.bf16.mxu0 0
        %965 = vmatmul.mubr.bf16.gmra.mrb[0].mxu0 %v926
        %v966 = vpop.f32.mrb[0].mxu0
        %v967 = vadd.f32 0.0, %v966
        %v968 = vpop.f32.mrb[0].mxu0
        %v969 = vpop.f32.mrb[0].mxu0
        %v970 = vpop.f32.mrb[0].mxu0
        %971 = vdwg.mxu0
        %v973 = vsel %vm692, %v922, 0
        %v976 = vsel %vm928, %v685, 0
        %978 = vmatprep.subr.bf16.mxu0 0
        %979 = vmatpush1.bf16.msra.mxu0 %v976
        %980 = vmatprep.subr.bf16.mxu0 0
        %981 = vmatpush1.bf16.msra.mxu0 0
        %982 = vmatprep.subr.bf16.mxu0 0
        %983 = vmatpush1.bf16.msra.mxu0 0
        %984 = vmatprep.subr.bf16.mxu0 0
        %985 = vmatpush1.bf16.msra.mxu0 0
        %986 = vmatprep.subr.bf16.mxu0 0
        %987 = vmatpush1.bf16.msra.mxu0 0
        %988 = vmatprep.subr.bf16.mxu0 0
        %989 = vmatpush1.bf16.msra.mxu0 0
        %990 = vmatprep.subr.bf16.mxu0 0
        %991 = vmatpush1.bf16.msra.mxu0 0
        %992 = vmatprep.subr.bf16.mxu0 0
        %993 = vmatpush1.bf16.msra.mxu0 0
        %994 = vmatprep.subr.bf16.mxu0 0
        %995 = vmatpush1.bf16.msra.mxu0 0
        %996 = vmatprep.subr.bf16.mxu0 0
        %997 = vmatpush1.bf16.msra.mxu0 0
        %998 = vmatprep.subr.bf16.mxu0 0
        %999 = vmatpush1.bf16.msra.mxu0 0
        %1000 = vmatprep.subr.bf16.mxu0 0
        %1001 = vmatpush1.bf16.msra.mxu0 0
        %1002 = vmatprep.subr.bf16.mxu0 0
        %1003 = vmatpush1.bf16.msra.mxu0 0
        %1004 = vmatprep.subr.bf16.mxu0 0
        %1005 = vmatpush1.bf16.msra.mxu0 0
        %1006 = vmatprep.subr.bf16.mxu0 0
        %1007 = vmatpush1.bf16.msra.mxu0 0
        %1008 = vmatprep.subr.bf16.mxu0 0
        %1009 = vmatpush1.bf16.msra.mxu0 0
        %1010 = vmatprep.mubr.bf16.mxu0 0
        %1011 = vmatmul.mubr.bf16.gmra.mrb[0].mxu0 %v973
        %v1012 = vpop.f32.mrb[0].mxu0
        %v1013 = vadd.f32 0.0, %v1012
        %v1014 = vpop.f32.mrb[0].mxu0
        %v1015 = vpop.f32.mrb[0].mxu0
        %v1016 = vpop.f32.mrb[0].mxu0
        %1017 = vdwg.mxu0
        %v1019 = vsel %vm692, %v923, 0
        %v1022 = vsel %vm928, %v688, 0
        %1024 = vmatprep.subr.bf16.mxu0 0
        %1025 = vmatpush1.bf16.msra.mxu0 %v1022
        %1026 = vmatprep.subr.bf16.mxu0 0
        %1027 = vmatpush1.bf16.msra.mxu0 0
        %1028 = vmatprep.subr.bf16.mxu0 0
        %1029 = vmatpush1.bf16.msra.mxu0 0
        %1030 = vmatprep.subr.bf16.mxu0 0
        %1031 = vmatpush1.bf16.msra.mxu0 0
        %1032 = vmatprep.subr.bf16.mxu0 0
        %1033 = vmatpush1.bf16.msra.mxu0 0
        %1034 = vmatprep.subr.bf16.mxu0 0
        %1035 = vmatpush1.bf16.msra.mxu0 0
        %1036 = vmatprep.subr.bf16.mxu0 0
        %1037 = vmatpush1.bf16.msra.mxu0 0
        %1038 = vmatprep.subr.bf16.mxu0 0
        %1039 = vmatpush1.bf16.msra.mxu0 0
        %1040 = vmatprep.subr.bf16.mxu0 0
        %1041 = vmatpush1.bf16.msra.mxu0 0
        %1042 = vmatprep.subr.bf16.mxu0 0
        %1043 = vmatpush1.bf16.msra.mxu0 0
        %1044 = vmatprep.subr.bf16.mxu0 0
        %1045 = vmatpush1.bf16.msra.mxu0 0
        %1046 = vmatprep.subr.bf16.mxu0 0
        %1047 = vmatpush1.bf16.msra.mxu0 0
        %1048 = vmatprep.subr.bf16.mxu0 0
        %1049 = vmatpush1.bf16.msra.mxu0 0
        %1050 = vmatprep.subr.bf16.mxu0 0
        %1051 = vmatpush1.bf16.msra.mxu0 0
        %1052 = vmatprep.subr.bf16.mxu0 0
        %1053 = vmatpush1.bf16.msra.mxu0 0
        %1054 = vmatprep.subr.bf16.mxu0 0
        %1055 = vmatpush1.bf16.msra.mxu0 0
        %1056 = vmatprep.mubr.bf16.mxu0 0
        %1057 = vmatmul.mubr.bf16.gmra.mrb[0].mxu0 %v1019
        %v1058 = vpop.f32.mrb[0].mxu0
        %v1059 = vadd.f32 0.0, %v1058
        %v1060 = vpop.f32.mrb[0].mxu0
        %v1061 = vpop.f32.mrb[0].mxu0
        %v1062 = vpop.f32.mrb[0].mxu0
        %1063 = vdwg.mxu0
        %v1065 = vsel %vm692, %v924, 0
        %v1068 = vsel %vm928, %v691, 0
        %1070 = vmatprep.subr.bf16.mxu0 0
        %1071 = vmatpush1.bf16.msra.mxu0 %v1068
        %1072 = vmatprep.subr.bf16.mxu0 0
        %1073 = vmatpush1.bf16.msra.mxu0 0
        %1074 = vmatprep.subr.bf16.mxu0 0
        %1075 = vmatpush1.bf16.msra.mxu0 0
        %1076 = vmatprep.subr.bf16.mxu0 0
        %1077 = vmatpush1.bf16.msra.mxu0 0
        %1078 = vmatprep.subr.bf16.mxu0 0
        %1079 = vmatpush1.bf16.msra.mxu0 0
        %1080 = vmatprep.subr.bf16.mxu0 0
        %1081 = vmatpush1.bf16.msra.mxu0 0
        %1082 = vmatprep.subr.bf16.mxu0 0
        %1083 = vmatpush1.bf16.msra.mxu0 0
        %1084 = vmatprep.subr.bf16.mxu0 0
        %1085 = vmatpush1.bf16.msra.mxu0 0
        %1086 = vmatprep.subr.bf16.mxu0 0
        %1087 = vmatpush1.bf16.msra.mxu0 0
        %1088 = vmatprep.subr.bf16.mxu0 0
        %1089 = vmatpush1.bf16.msra.mxu0 0
        %1090 = vmatprep.subr.bf16.mxu0 0
        %1091 = vmatpush1.bf16.msra.mxu0 0
        %1092 = vmatprep.subr.bf16.mxu0 0
        %1093 = vmatpush1.bf16.msra.mxu0 0
        %1094 = vmatprep.subr.bf16.mxu0 0
        %1095 = vmatpush1.bf16.msra.mxu0 0
        %1096 = vmatprep.subr.bf16.mxu0 0
        %1097 = vmatpush1.bf16.msra.mxu0 0
        %1098 = vmatprep.subr.bf16.mxu0 0
        %1099 = vmatpush1.bf16.msra.mxu0 0
        %1100 = vmatprep.subr.bf16.mxu0 0
        %1101 = vmatpush1.bf16.msra.mxu0 0
        %1102 = vmatprep.mubr.bf16.mxu0 0
        %1103 = vmatmul.mubr.bf16.gmra.mrb[0].mxu0 %v1065
        %v1104 = vpop.f32.mrb[0].mxu0
        %v1105 = vadd.f32 0.0, %v1104
        %v1106 = vpop.f32.mrb[0].mxu0
        %v1107 = vpop.f32.mrb[0].mxu0
        %v1108 = vpop.f32.mrb[0].mxu0
        %1109 = vdwg.mxu0
        %v1110 = vpack.c.bf16 %v967, %v967
        %v1112 = vunpack.c.l.s4 1983009808
        %v1113 = vunpack.c.0.s8 %v1112
        %v1114 = vlaneseq
        %v1115 = vshrl.u32 %v1114, 7
        %v1116 = vsub.s32 %v1113, %v1115
        %v1117 = vrot.slane %v1110, %v1116
        %v1118 = vpack.c.bf16 %v1059, %v1059
        %v1120 = vunpack.c.l.s4 1983009808
        %v1121 = vunpack.c.0.s8 %v1120
        %v1122 = vlaneseq
        %v1123 = vshrl.u32 %v1122, 7
        %v1124 = vsub.s32 %v1121, %v1123
        %v1125 = vrot.slane %v1118, %v1124
        %v1126 = vcombine.low %v1117, %v1125
        %v1127 = vcombine.high %v1117, %v1125
        %v1129 = vunpack.c.l.s4 1934713408
        %v1130 = vunpack.c.0.s8 %v1129
        %v1131 = vlaneseq
        %v1132 = vshrl.u32 %v1131, 7
        %v1133 = vsub.s32 %v1130, %v1132
        %v1134 = vrot.slane %v1126, %v1133
        %v1136 = vunpack.c.l.s4 1934713408
        %v1137 = vunpack.c.0.s8 %v1136
        %v1138 = vlaneseq
        %v1139 = vshrl.u32 %v1138, 7
        %v1140 = vsub.s32 %v1137, %v1139
        %v1141 = vrot.slane %v1127, %v1140
        %v1142 = vcombine.high %v1134, 0
        %v1143 = vcombine.high %v1141, 0
        %v1144 = vpack.c.bf16 %v1013, %v1013
        %v1146 = vunpack.c.l.s4 1983009808
        %v1147 = vunpack.c.0.s8 %v1146
        %v1148 = vlaneseq
        %v1149 = vshrl.u32 %v1148, 7
        %v1150 = vsub.s32 %v1147, %v1149
        %v1151 = vrot.slane %v1144, %v1150
        %v1152 = vpack.c.bf16 %v1105, %v1105
        %v1154 = vunpack.c.l.s4 1983009808
        %v1155 = vunpack.c.0.s8 %v1154
        %v1156 = vlaneseq
        %v1157 = vshrl.u32 %v1156, 7
        %v1158 = vsub.s32 %v1155, %v1157
        %v1159 = vrot.slane %v1152, %v1158
        %v1160 = vcombine.low %v1151, %v1159
        %v1161 = vcombine.high %v1151, %v1159
        %v1163 = vunpack.c.l.s4 1934713408
        %v1164 = vunpack.c.0.s8 %v1163
        %v1165 = vlaneseq
        %v1166 = vshrl.u32 %v1165, 7
        %v1167 = vsub.s32 %v1164, %v1166
        %v1168 = vrot.slane %v1160, %v1167
        %v1170 = vunpack.c.l.s4 1934713408
        %v1171 = vunpack.c.0.s8 %v1170
        %v1172 = vlaneseq
        %v1173 = vshrl.u32 %v1172, 7
        %v1174 = vsub.s32 %v1171, %v1173
        %v1175 = vrot.slane %v1161, %v1174
        %v1176 = vcombine.high %v1168, 0
        %v1177 = vcombine.high %v1175, 0
        %v1180 = vpack.i.b16 %v1168, %v1134
        %v1182 = vshrl.u32 %v1134, 16
        %v1183 = vshrl.u32 %v1168, 16
        %v1184 = vpack.i.b16 %v1183, %v1182
        %v1188 = vpack.i.b16 %v1176, %v1142
        %v1190 = vshrl.u32 %v1142, 16
        %v1191 = vshrl.u32 %v1176, 16
        %v1192 = vpack.i.b16 %v1191, %v1190
        %v1196 = vpack.i.b16 %v1175, %v1141
        %v1198 = vshrl.u32 %v1141, 16
        %v1199 = vshrl.u32 %v1175, 16
        %v1200 = vpack.i.b16 %v1199, %v1198
        %v1204 = vpack.i.b16 %v1177, %v1143
        %v1206 = vshrl.u32 %v1143, 16
        %v1207 = vshrl.u32 %v1177, 16
        %v1208 = vpack.i.b16 %v1207, %v1206
        %v1210 = vcombine.low %v1180, %v1196
        %v1212 = vunpack.c.l.s4 1983009808
        %v1213 = vunpack.c.0.s8 %v1212
        %v1214 = vlaneseq
        %v1215 = vshrl.u32 %v1214, 7
        %v1216 = vsub.s32 %v1213, %v1215
        %v1217 = vrot.slane %v1210, %v1216
        %v1218 = vcombine.low %v1188, %v1204
        %v1220 = vunpack.c.l.s4 1983009808
        %v1221 = vunpack.c.0.s8 %v1220
        %v1222 = vlaneseq
        %v1223 = vshrl.u32 %v1222, 7
        %v1224 = vsub.s32 %v1221, %v1223
        %v1225 = vrot.slane %v1218, %v1224
        %v1226 = vcombine.low %v1217, %v1225
        %v1228 = vunpack.c.l.s4 1934713408
        %v1229 = vunpack.c.0.s8 %v1228
        %v1230 = vlaneseq
        %v1231 = vshrl.u32 %v1230, 7
        %v1232 = vsub.s32 %v1229, %v1231
        %v1233 = vrot.slane %v1226, %v1232
        %v1234 = vcombine.high %v1233, 0
        %v1235 = vcombine.low %v1184, %v1200
        %v1237 = vunpack.c.l.s4 1983009808
        %v1238 = vunpack.c.0.s8 %v1237
        %v1239 = vlaneseq
        %v1240 = vshrl.u32 %v1239, 7
        %v1241 = vsub.s32 %v1238, %v1240
        %v1242 = vrot.slane %v1235, %v1241
        %v1243 = vcombine.low %v1192, %v1208
        %v1245 = vunpack.c.l.s4 1983009808
        %v1246 = vunpack.c.0.s8 %v1245
        %v1247 = vlaneseq
        %v1248 = vshrl.u32 %v1247, 7
        %v1249 = vsub.s32 %v1246, %v1248
        %v1250 = vrot.slane %v1243, %v1249
        %v1251 = vcombine.low %v1242, %v1250
        %v1253 = vunpack.c.l.s4 1934713408
        %v1254 = vunpack.c.0.s8 %v1253
        %v1255 = vlaneseq
        %v1256 = vshrl.u32 %v1255, 7
        %v1257 = vsub.s32 %v1254, %v1256
        %v1258 = vrot.slane %v1251, %v1257
        %v1259 = vcombine.high %v1258, 0
        %v1262 = vpack.i.b16 %v1258, %v1233
        %v1263 = vshrl.u32 %v1233, 16
        %v1264 = vshrl.u32 %v1258, 16
        %v1265 = vpack.i.b16 %v1264, %v1263
        %v1268 = vpack.i.b16 %v1259, %v1234
        %v1269 = vshrl.u32 %v1234, 16
        %v1270 = vshrl.u32 %v1259, 16
        %v1271 = vpack.i.b16 %v1270, %v1269
        %1272 = vrot.lane.b32.xlu0 %v1265, 8
        %v1273 = vpop.permute.xlu0 %1272
        %1274 = vrot.lane.b32.xlu0 %v1268, 16
        %v1275 = vpop.permute.xlu0 %1274
        %1276 = vrot.lane.b32.xlu0 %v1271, 24
        %v1277 = vpop.permute.xlu0 %1276
        %v1280 = vsel %vm692, %v1262, %v1273
        %vm1281 = vcmask 130048
        %v1283 = vsel %vm1281, %v1280, %v1275
        %vm1284 = vcmask 195584
        %v1286 = vsel %vm1284, %v1283, %v1277
        %v1287 = vld [vmem:[#allocation7] sm:$0xf]
        %v1288 = vld [vmem:[#allocation7 + $0x4] sm:$0xf]
        %v1289 = vld [vmem:[#allocation7 + $0x8] sm:$0xf]
        %v1290 = vld [vmem:[#allocation7 + $0xc] sm:$0xf]
        %v1291 = vld [vmem:[%s4] sm:$0x1]
        %v1293 = vlaneseq
        %v1294 = vshrl.u32 %v1293, 7
        %v1295 = vsub.s32 0, %v1294
        %v1296 = vrot.slane %v1291, %v1295
        %v1302 = vunpack.c.l.b16 %v1287
        %v1303 = vunpack.c.l.b16 %v1288
        %v1304 = vunpack.c.l.b16 %v1289
        %v1305 = vunpack.c.l.b16 %v1290
        %v1306 = vpack.c.b16 %v1303, %v1302
        %v1307 = vpack.c.b16 %v1305, %v1304
        %v1310 = vsel %vm295, %v1286, 0
        %1312 = vmatprep.subr.bf16.mxu0 0
        %1313 = vmatpush1.bf16.msra.mxu0 %v1306
        %1314 = vmatprep.subr.bf16.mxu0 0
        %1315 = vmatpush1.bf16.msra.mxu0 %v1307
        %1316 = vmatprep.subr.bf16.mxu0 0
        %1317 = vmatpush1.bf16.msra.mxu0 0
        %1318 = vmatprep.subr.bf16.mxu0 0
        %1319 = vmatpush1.bf16.msra.mxu0 0
        %1320 = vmatprep.subr.bf16.mxu0 0
        %1321 = vmatpush1.bf16.msra.mxu0 0
        %1322 = vmatprep.subr.bf16.mxu0 0
        %1323 = vmatpush1.bf16.msra.mxu0 0
        %1324 = vmatprep.subr.bf16.mxu0 0
        %1325 = vmatpush1.bf16.msra.mxu0 0
        %1326 = vmatprep.subr.bf16.mxu0 0
        %1327 = vmatpush1.bf16.msra.mxu0 0
        %1328 = vmatprep.subr.bf16.mxu0 0
        %1329 = vmatpush1.bf16.msra.mxu0 0
        %1330 = vmatprep.subr.bf16.mxu0 0
        %1331 = vmatpush1.bf16.msra.mxu0 0
        %1332 = vmatprep.subr.bf16.mxu0 0
        %1333 = vmatpush1.bf16.msra.mxu0 0
        %1334 = vmatprep.subr.bf16.mxu0 0
        %1335 = vmatpush1.bf16.msra.mxu0 0
        %1336 = vmatprep.subr.bf16.mxu0 0
        %1337 = vmatpush1.bf16.msra.mxu0 0
        %1338 = vmatprep.subr.bf16.mxu0 0
        %1339 = vmatpush1.bf16.msra.mxu0 0
        %1340 = vmatprep.subr.bf16.mxu0 0
        %1341 = vmatpush1.bf16.msra.mxu0 0
        %1342 = vmatprep.subr.bf16.mxu0 0
        %1343 = vmatpush1.bf16.msra.mxu0 0
        %1344 = vmatprep.mubr.bf16.mxu0 0
        %1345 = vmatmul.mubr.bf16.gmra.mrb[0].mxu0 %v1310
        %v1346 = vpop.f32.mrb[0].mxu0
        %v1347 = vadd.f32 %v1296, %v1346
        %v1348 = vpop.f32.mrb[0].mxu0
        %v1349 = vpop.f32.mrb[0].mxu0
        %v1350 = vpop.f32.mrb[0].mxu0
        %1351 = vdwg.mxu0
        %1352 = vst.msk [vmem:[%s268] sm:$0xff] %vm295, %v1347
        %s1353 = sand.u32 %s141, 1
        %s1354 = scalar_lea.sflag [#allocation4], %s1353
        %s1355 = sand.u32 %s141, 1
        %s1356 = smul.addr %s1355, 8
        %s1357 = scalar_lea.vmem [#allocation8], %s1356
        // Predicated region
        $region53: #{tpu_custom_call.1} parent=39 // pred_check
          %p1358 = pneg %p151
        $region54: #{tpu_custom_call.1} parent=39 // pred_check_branch
          %1360 = sbr.rel (%p1358) target = $region56
        $region55: #{tpu_custom_call.1} parent=39 // pred_region
          %s1362 = ssub.s32 128, 128
          %1363 = vsyncadd %s1354, %s1362
          %s1364 = smul.addr %s23, 128
          %s1365 = scalar_lea.hbm %s5, %s1364
          %s1367 = sshll.u32 %s1357, 4
          %s1368 = int_to_ptr.vmem [resolvable:$true] %s1367
          %1370 = dma.vmem_to_hbm [thread:$0]  %s1368, 128, %s1365, %s1354
        $region56: #{tpu_custom_call.1} parent=39 // pred_fallthru
          _
      $region40: #{tpu_custom_call.1} parent=5 // pred_fallthru
        _
      %p1371 = scmp.le.s32.totalorder 2, %s18
      // Predicated region
      $region57: #{tpu_custom_call.1} parent=5 // pred_check
        %p1372 = pneg %p1371
      $region58: #{tpu_custom_call.1} parent=5 // pred_check_branch
        %1374 = sbr.rel (%p1372) target = $region60
      $region59: #{tpu_custom_call.1} parent=5 // pred_region
        %s1375 = ssub.s32 %s18, 2
        // Predicated region
        $region61: #{tpu_custom_call.1} parent=59 // pred_check
          %p1376 = pneg %p157
        $region62: #{tpu_custom_call.1} parent=59 // pred_check_branch
          %1378 = sbr.rel (%p1376) target = $region64
        $region63: #{tpu_custom_call.1} parent=59 // pred_region
          %s1379 = sand.u32 %s142, 1
          %s1380 = scalar_lea.sflag [#allocation4], %s1379
          %s1381 = sand.u32 %s142, 1
          %s1382 = smul.addr %s1381, 8
          %s1383 = scalar_lea.vmem [#allocation8], %s1382
          %1384 = dma.done %s1380, 128
        $region64: #{tpu_custom_call.1} parent=59 // pred_fallthru
          _
      $region60: #{tpu_custom_call.1} parent=5 // pred_fallthru
        _
    $region6: #{tpu_custom_call.1} parent=1 // loop_footer
      %s22 = sadd.s32 1, %s18
    $region7: #{tpu_custom_call.1} parent=1 // loop_footer_branch
      %17 = sbr.rel target = $region3
    $region8: #{tpu_custom_call.1} parent=1 // loop_exit
      _
    %1385 = vsyncpa [#allocation3], 1
    %s1386 = scalar_lea.sflag [#allocation3], 1
    %1387 = vsyncpa %s1386, 1
    %1388 = vsyncpa [#allocation6], 1
    %1389 = vsyncpa [#allocation4], 1
    %s1390 = scalar_lea.sflag [#allocation4], 1
    %1391 = vsyncpa %s1390, 1

</llo_original>
